<compile_context>
chip_gen: v6e
topology: v6e:2x2x1
jax: 0.10.0
libtpu: 0.0.40
codegen_flags: <defaults>
</compile_context>

<pallas_src>
import functools

import jax
import jax.numpy as jnp
from jax.experimental import pallas as pl
from jax.experimental.pallas import tpu as pltpu

STATE_DIM = 4
HIDDEN_DIM = 128
ACTION_DIM = 2
DEFAULT_BATCH_TILE = 4096  # lanes (batch rows) per grid step


def policy_net_kernel(xT_ref, p_ref, o_ref):
    """One lane-dense batch tile (batch along lanes).

    xT_ref : [4, Bt]   f32  transposed states (input feature k in sublane k)
    p_ref  : [128, 8]  f32  packed parameters (hidden dim along sublanes):
               cols 0..3 -> w1[k, :]            (fc1 weight column for input k)
               col  4    -> b1
               col  5    -> w2[:, 1] - w2[:, 0] (fused fc2 logit-diff weights)
               col  6    -> b2[1] - b2[0]       (replicated down the column)
               col  7    -> rows (0, 1) = (-1, +1) sign pattern, rest 0
    o_ref  : [2, Bt]   f32  row 0 = P(action 0), row 1 = P(action 1)
    """
    xT = xT_ref[...]                                            # [4, Bt]

    # ---- fc1 + ReLU on the VPU: h[j, b] = relu(sum_k w1[k, j] * x[b, k] + b1[j]) ----
    # w1 columns are batch-invariant [128, 1] lane broadcasts (hoisted once);
    # the x rows are cheap sublane broadcasts.
    acc = p_ref[:, 0:1] * xT[0:1, :]
    acc = acc + p_ref[:, 1:2] * xT[1:2, :]
    acc = acc + p_ref[:, 2:3] * xT[2:3, :]
    acc = acc + p_ref[:, 3:4] * xT[3:4, :]
    h = jnp.maximum(acc + p_ref[:, 4:5], 0.0)                   # [128, Bt]

    # ---- fused fc2 + 2-way softmax: d = logit1 - logit0, probs = sigmoid(+/- d) ----
    d = jnp.sum(h * p_ref[:, 5:6], axis=0, keepdims=True) + p_ref[0:1, 6:7]   # [1, Bt]
    sign = p_ref[0:ACTION_DIM, 7:8]                             # [2, 1] = [[-1], [+1]]
    # numerically stable sigmoid via one EUP tanh: sigmoid(s*d) = 0.5*(tanh(s*d/2)+1)
    probs = 0.5 * (jnp.tanh((0.5 * sign) * d) + 1.0)            # [2, Bt]
    o_ref[...] = probs.astype(o_ref.dtype)                      # single lane-dense store


def pack_params(w1, b1, w2, b2):
    """Pack fc1/fc2 parameters into one [HIDDEN_DIM, 8] f32 slab (hidden on sublanes)."""
    w1 = jnp.asarray(w1, jnp.float32).reshape(STATE_DIM, HIDDEN_DIM)
    b1 = jnp.asarray(b1, jnp.float32).reshape(HIDDEN_DIM)
    w2 = jnp.asarray(w2, jnp.float32).reshape(HIDDEN_DIM, ACTION_DIM)
    b2 = jnp.asarray(b2, jnp.float32).reshape(ACTION_DIM)
    sign = jnp.zeros((HIDDEN_DIM, 1), jnp.float32).at[0, 0].set(-1.0).at[1, 0].set(1.0)
    cols = [
        w1.T,                                                    # [128, 4]  w1 columns
        b1[:, None],                                             # [128, 1]  b1
        (w2[:, 1] - w2[:, 0])[:, None],                          # [128, 1]  logit-diff weights
        jnp.full((HIDDEN_DIM, 1), b2[1] - b2[0], jnp.float32),   # [128, 1]  logit-diff bias
        sign,                                                    # [128, 1]  (-1, +1) pattern
    ]
    return jnp.concatenate(cols, axis=1)                         # [128, 8]


@functools.partial(jax.jit, static_argnames=("tile",))
def _policy_forward_padded(xp, packed, *, tile):
    """xp: [Bp, 4] (Bp an exact multiple of `tile`) -> probs [Bp, 2] f32."""
    b_pad = xp.shape[0]
    xT = xp.astype(jnp.float32).T                                # [4, Bp] lane-dense states
    probs_t = pl.pallas_call(
        policy_net_kernel,
        out_shape=jax.ShapeDtypeStruct((ACTION_DIM, b_pad), jnp.float32),
        grid_spec=pltpu.PrefetchScalarGridSpec(
            num_scalar_prefetch=0,
            grid=(b_pad // tile,),
            in_specs=[
                pl.BlockSpec((STATE_DIM, tile), lambda i: (0, i)),   # states, tiled over batch lanes
                pl.BlockSpec((HIDDEN_DIM, 8), lambda i: (0, 0)),     # packed params (VMEM resident)
            ],
            out_specs=pl.BlockSpec((ACTION_DIM, tile), lambda i: (0, i)),
        ),
        compiler_params=pltpu.CompilerParams(
            dimension_semantics=("parallel",)),   # multi-step grids shard across 2 TCs on v7x
    )(xT, packed)
    return probs_t.T                                             # [Bp, 2]


def _batch_plan(batch, batch_tile):
    """Bucketed padded batch + lane tile with b_pad == grid_steps * tile (tile % 128 == 0)."""
    b128 = pl.cdiv(batch, 128) * 128
    # Bucket rollout lengths so repeated episodes reuse the same compiled executable.
    bucket = b128 if b128 <= 1024 else pl.cdiv(b128, 1024) * 1024
    n_steps = pl.cdiv(bucket, batch_tile)
    tile = pl.cdiv(bucket // 128, n_steps) * 128
    return n_steps * tile, tile


def make_policy_net_forward(w1, b1, w2, b2, *, batch_tile=DEFAULT_BATCH_TILE):
    """Pack parameters once and return a jit-backed forward: x[B,4] -> probs[B,2]."""
    assert batch_tile % 128 == 0, "batch_tile must be a multiple of 128 lanes"
    packed = pack_params(w1, b1, w2, b2)   # computed once, cached on device

    def forward(x):
        batch = x.shape[0]
        b_pad, tile = _batch_plan(batch, batch_tile)
        xp = x if batch == b_pad else jnp.pad(x, ((0, b_pad - batch), (0, 0)))
        out = _policy_forward_padded(xp, packed, tile=tile)
        return out if batch == b_pad else out[:batch]

    return forward


def policy_net_forward(x, w1, b1, w2, b2, *, batch_tile=DEFAULT_BATCH_TILE):
    """One-shot convenience wrapper (prefer make_policy_net_forward to cache packing)."""
    return make_policy_net_forward(w1, b1, w2, b2, batch_tile=batch_tile)(x)


def init_params(key):
    """Deterministic synthetic init (PyTorch Linear-style uniform bounds)."""
    k1, k2, k3, k4 = jax.random.split(key, 4)
    bound1 = 1.0 / jnp.sqrt(jnp.float32(STATE_DIM))
    bound2 = 1.0 / jnp.sqrt(jnp.float32(HIDDEN_DIM))
    # stored as [in, out] (transposed vs PyTorch's [out, in])
    w1 = jax.random.uniform(k1, (STATE_DIM, HIDDEN_DIM), jnp.float32, -bound1, bound1)
    b1 = jax.random.uniform(k2, (HIDDEN_DIM,), jnp.float32, -bound1, bound1)
    w2 = jax.random.uniform(k3, (HIDDEN_DIM, ACTION_DIM), jnp.float32, -bound2, bound2)
    b2 = jax.random.uniform(k4, (ACTION_DIM,), jnp.float32, -bound2, bound2)
    return w1, b1, w2, b2


if __name__ == "__main__":
    # CartPole-v1: state_dim=4, hidden_dim=128, action_dim=2
    key = jax.random.PRNGKey(0)
    kx, kp, kx2 = jax.random.split(key, 3)
    w1, b1, w2, b2 = init_params(kp)

    hi = jax.lax.Precision.HIGHEST

    def reference(xs):
        h = jnp.maximum(jnp.dot(xs, w1, precision=hi) + b1, 0.0)
        return jax.nn.softmax(jnp.dot(h, w2, precision=hi) + b2, axis=1)

    forward = make_policy_net_forward(w1, b1, w2, b2)

    # Small-batch case (matches the original usage: a couple of env states).
    x_small = jax.random.normal(kx, (2, STATE_DIM), jnp.float32)
    probs = jax.block_until_ready(forward(x_small))
    assert probs.shape == (2, ACTION_DIM)
    assert jnp.allclose(probs, reference(x_small), atol=1e-5)
    assert jnp.allclose(jnp.sum(probs, axis=1), 1.0, atol=1e-5)

    # Batched-rollout case: exercises bucketing, padding and the lane-dense layout.
    x_big = jax.random.normal(kx2, (1000, STATE_DIM), jnp.float32)
    probs_big = jax.block_until_ready(forward(x_big))
    assert probs_big.shape == (1000, ACTION_DIM)
    assert jnp.allclose(probs_big, reference(x_big), atol=1e-5)
    assert jnp.allclose(jnp.sum(probs_big, axis=1), 1.0, atol=1e-5)

    # Multi-step grid case (grid=2, "parallel" batch axis -> both TCs on v7x).
    forward_2step = make_policy_net_forward(w1, b1, w2, b2, batch_tile=512)
    probs_2step = jax.block_until_ready(forward_2step(x_big))
    assert probs_2step.shape == (1000, ACTION_DIM)
    assert jnp.allclose(probs_2step, reference(x_big), atol=1e-5)

    print("KERNEL_OK")
</pallas_src>

<mosaic_0001>
module attributes {stable_mosaic.version = 11 : i64} {
  func.func @policy_net_kernel(%arg0: i32, %arg1: memref<4x128xf32, #tpu.memory_space<vmem>>, %arg2: memref<128x8xf32, #tpu.memory_space<vmem>>, %arg3: memref<2x128xf32, #tpu.memory_space<vmem>>) attributes {dimension_semantics = [#tpu.dimension_semantics<parallel>], iteration_bounds = array<i64: 1>, scalar_prefetch = 0 : i64, scratch_operands = 0 : i64, tpu.core_type = #tpu.core_type<tc>, window_params = [{transform_indices = @transform_0, window_bounds = array<i64: 4, 128>}, {pipeline_mode = #tpu.pipeline_mode<synchronous>, transform_indices = @transform_1, window_bounds = array<i64: 128, 8>}, {transform_indices = @transform_2, window_bounds = array<i64: 2, 128>}]} {
    %c0 = arith.constant 0 : index
    %c0_0 = arith.constant 0 : index
    %0 = vector.load %arg1[%c0, %c0_0] : memref<4x128xf32, #tpu.memory_space<vmem>>, vector<4x128xf32>
    %c0_1 = arith.constant 0 : index
    %c0_2 = arith.constant 0 : index
    %1 = vector.load %arg2[%c0_1, %c0_2] : memref<128x8xf32, #tpu.memory_space<vmem>>, vector<128x1xf32>
    %2 = vector.extract_strided_slice %0 {offsets = [0, 0], sizes = [1, 128], strides = [1, 1]} : vector<4x128xf32> to vector<1x128xf32>
    %3 = vector.broadcast %1 : vector<128x1xf32> to vector<128x128xf32>
    %4 = vector.broadcast %2 : vector<1x128xf32> to vector<128x128xf32>
    %5 = arith.mulf %3, %4 : vector<128x128xf32>
    %c0_3 = arith.constant 0 : index
    %c1 = arith.constant 1 : index
    %6 = vector.load %arg2[%c0_3, %c1] : memref<128x8xf32, #tpu.memory_space<vmem>>, vector<128x1xf32>
    %7 = vector.extract_strided_slice %0 {offsets = [1, 0], sizes = [1, 128], strides = [1, 1]} : vector<4x128xf32> to vector<1x128xf32>
    %8 = vector.broadcast %6 : vector<128x1xf32> to vector<128x128xf32>
    %9 = vector.broadcast %7 : vector<1x128xf32> to vector<128x128xf32>
    %10 = arith.mulf %8, %9 : vector<128x128xf32>
    %11 = arith.addf %5, %10 : vector<128x128xf32>
    %c0_4 = arith.constant 0 : index
    %c2 = arith.constant 2 : index
    %12 = vector.load %arg2[%c0_4, %c2] : memref<128x8xf32, #tpu.memory_space<vmem>>, vector<128x1xf32>
    %13 = vector.extract_strided_slice %0 {offsets = [2, 0], sizes = [1, 128], strides = [1, 1]} : vector<4x128xf32> to vector<1x128xf32>
    %14 = vector.broadcast %12 : vector<128x1xf32> to vector<128x128xf32>
    %15 = vector.broadcast %13 : vector<1x128xf32> to vector<128x128xf32>
    %16 = arith.mulf %14, %15 : vector<128x128xf32>
    %17 = arith.addf %11, %16 : vector<128x128xf32>
    %c0_5 = arith.constant 0 : index
    %c3 = arith.constant 3 : index
    %18 = vector.load %arg2[%c0_5, %c3] : memref<128x8xf32, #tpu.memory_space<vmem>>, vector<128x1xf32>
    %19 = vector.extract_strided_slice %0 {offsets = [3, 0], sizes = [1, 128], strides = [1, 1]} : vector<4x128xf32> to vector<1x128xf32>
    %20 = vector.broadcast %18 : vector<128x1xf32> to vector<128x128xf32>
    %21 = vector.broadcast %19 : vector<1x128xf32> to vector<128x128xf32>
    %22 = arith.mulf %20, %21 : vector<128x128xf32>
    %23 = arith.addf %17, %22 : vector<128x128xf32>
    %c0_6 = arith.constant 0 : index
    %c4 = arith.constant 4 : index
    %24 = vector.load %arg2[%c0_6, %c4] : memref<128x8xf32, #tpu.memory_space<vmem>>, vector<128x1xf32>
    %25 = vector.broadcast %24 : vector<128x1xf32> to vector<128x128xf32>
    %26 = arith.addf %23, %25 : vector<128x128xf32>
    %cst = arith.constant 0.000000e+00 : f32
    %27 = vector.broadcast %cst : f32 to vector<128x128xf32>
    %28 = arith.maximumf %26, %27 : vector<128x128xf32>
    %c0_7 = arith.constant 0 : index
    %c5 = arith.constant 5 : index
    %29 = vector.load %arg2[%c0_7, %c5] : memref<128x8xf32, #tpu.memory_space<vmem>>, vector<128x1xf32>
    %30 = vector.broadcast %29 : vector<128x1xf32> to vector<128x128xf32>
    %31 = arith.mulf %28, %30 : vector<128x128xf32>
    %cst_8 = arith.constant dense<0.000000e+00> : vector<128xf32>
    %32 = vector.multi_reduction <add>, %31, %cst_8 [0] : vector<128x128xf32> to vector<128xf32>
    %33 = vector.shape_cast %32 : vector<128xf32> to vector<1x128xf32>
    %c0_9 = arith.constant 0 : index
    %c6 = arith.constant 6 : index
    %34 = vector.load %arg2[%c0_9, %c6] : memref<128x8xf32, #tpu.memory_space<vmem>>, vector<1x1xf32>
    %35 = vector.broadcast %34 : vector<1x1xf32> to vector<1x128xf32>
    %36 = arith.addf %33, %35 : vector<1x128xf32>
    %c0_10 = arith.constant 0 : index
    %c7 = arith.constant 7 : index
    %37 = vector.load %arg2[%c0_10, %c7] : memref<128x8xf32, #tpu.memory_space<vmem>>, vector<2x1xf32>
    %cst_11 = arith.constant 5.000000e-01 : f32
    %38 = vector.broadcast %cst_11 : f32 to vector<2x1xf32>
    %39 = arith.mulf %38, %37 : vector<2x1xf32>
    %40 = vector.broadcast %39 : vector<2x1xf32> to vector<2x128xf32>
    %41 = vector.broadcast %36 : vector<1x128xf32> to vector<2x128xf32>
    %42 = arith.mulf %40, %41 : vector<2x128xf32>
    %43 = math.tanh %42 : vector<2x128xf32>
    %cst_12 = arith.constant 1.000000e+00 : f32
    %44 = vector.broadcast %cst_12 : f32 to vector<2x128xf32>
    %45 = arith.addf %43, %44 : vector<2x128xf32>
    %cst_13 = arith.constant 5.000000e-01 : f32
    %46 = vector.broadcast %cst_13 : f32 to vector<2x128xf32>
    %47 = arith.mulf %46, %45 : vector<2x128xf32>
    %c0_14 = arith.constant 0 : index
    %c0_15 = arith.constant 0 : index
    %48 = vector.load %arg3[%c0_14, %c0_15] : memref<2x128xf32, #tpu.memory_space<vmem>>, vector<2x128xf32>
    tpu.vector_store %arg3[%c0_14, %c0_15], %47 {strides = array<i32>} : memref<2x128xf32, #tpu.memory_space<vmem>>, vector<2x128xf32>,
    return
  }
  func.func @transform_0(%arg0: i32) -> (i32, i32) {
    %c0_i32 = arith.constant 0 : i32
    %c0_i32_0 = arith.constant 0 : i32
    return %c0_i32, %arg0 : i32, i32
  }
  func.func @transform_1(%arg0: i32) -> (i32, i32) {
    %c0_i32 = arith.constant 0 : i32
    %c0_i32_0 = arith.constant 0 : i32
    %c0_i32_1 = arith.constant 0 : i32
    return %c0_i32, %c0_i32_0 : i32, i32
  }
  func.func @transform_2(%arg0: i32) -> (i32, i32) {
    %c0_i32 = arith.constant 0 : i32
    %c0_i32_0 = arith.constant 0 : i32
    return %c0_i32, %arg0 : i32, i32
  }
}

</mosaic_0001>

<llo_original>
// kernel: _policy_forward_padded.1
$region0: #{_policy_forward_padded.1}
  #allocation0 [shape = 'u32[]', space=smem, size = 0x4, offset = 0x4, fixed_abs, tag = 'smem constant byte address 0x4 - core index']
  #allocation1 [shape = 'u32[144,128]{1,0:T(1,128)}', space=vmem, size = 0x12000, scoped, tag = 'internal scratch']
  %s0 = inlined_call_operand.vmem [shape: f32[4,128], index: 0, kind: input, shape index: {}]
  %s1 = inlined_call_operand.vmem [shape: f32[128,8], index: 1, kind: input, shape index: {}]
  %s2 = inlined_call_operand.hbm [shape: f32[2,128], index: 2, kind: output, shape index: {}]
  %s3 = sld [smem:[#allocation0]]
  $region18: #{_policy_forward_padded.1} parent=0
    _
  %s5 = ssub.s32 1, %s3
  %s6 = scalar_select 0, %s5, %s3
  $region1: #{_policy_forward_padded.1} parent=0
    #allocation2 [shape = 'u8[1024]{0}', space=vmem, size = 0x400, scoped, tag = 'output window, operand 0, single buffered']
    #allocation3 [shape = 's32[1]{0}', space=sflag, size = 0x4, scoped, tag = 'scoped memory for _policy_forward_padded.1']
    %7 = vsyncpa [#allocation3], 0
    // Predicated region
    $region2: #{_policy_forward_padded.1} parent=1 // pred_check
      _
    $region3: #{_policy_forward_padded.1} parent=1 // pred_check_branch
      %9 = sbr.rel (0) target = $region5
    $region4: #{_policy_forward_padded.1} parent=1 // pred_region
      _
    $region5: #{_policy_forward_padded.1} parent=1 // pred_fallthru
      _
    // Predicated region
    $region6: #{_policy_forward_padded.1} parent=1 // pred_check
      _
    $region7: #{_policy_forward_padded.1} parent=1 // pred_check_branch
      %11 = sbr.rel (0) target = $region9
    $region8: #{_policy_forward_padded.1} parent=1 // pred_region
      _
    $region9: #{_policy_forward_padded.1} parent=1 // pred_fallthru
      _
    %v12 = vld [vmem:[%s0] sm:$0xf]
    %v13 = vld [vmem:[%s1] sm:$0xff]
    %v14 = vld [vmem:[%s1 + $0x8] sm:$0xff]
    %v15 = vld [vmem:[%s1 + $0x10] sm:$0xff]
    %v16 = vld [vmem:[%s1 + $0x18] sm:$0xff]
    %v17 = vld [vmem:[%s1 + $0x20] sm:$0xff]
    %v18 = vld [vmem:[%s1 + $0x28] sm:$0xff]
    %v19 = vld [vmem:[%s1 + $0x30] sm:$0xff]
    %v20 = vld [vmem:[%s1 + $0x38] sm:$0xff]
    %v21 = vld [vmem:[%s1 + $0x40] sm:$0xff]
    %v22 = vld [vmem:[%s1 + $0x48] sm:$0xff]
    %v23 = vld [vmem:[%s1 + $0x50] sm:$0xff]
    %v24 = vld [vmem:[%s1 + $0x58] sm:$0xff]
    %v25 = vld [vmem:[%s1 + $0x60] sm:$0xff]
    %v26 = vld [vmem:[%s1 + $0x68] sm:$0xff]
    %v27 = vld [vmem:[%s1 + $0x70] sm:$0xff]
    %v28 = vld [vmem:[%s1 + $0x78] sm:$0xff]
    %30 = vset.pattern.permute.xlu0 0
    %31 = vperm.xlu0 %30, %v13
    %v32 = vpop.permute.xlu0 %31
    %35 = vset.pattern.permute.xlu0 0
    %36 = vperm.xlu0 %35, %v14
    %v37 = vpop.permute.xlu0 %36
    %40 = vset.pattern.permute.xlu0 0
    %41 = vperm.xlu0 %40, %v15
    %v42 = vpop.permute.xlu0 %41
    %45 = vset.pattern.permute.xlu0 0
    %46 = vperm.xlu0 %45, %v16
    %v47 = vpop.permute.xlu0 %46
    %50 = vset.pattern.permute.xlu0 0
    %51 = vperm.xlu0 %50, %v17
    %v52 = vpop.permute.xlu0 %51
    %55 = vset.pattern.permute.xlu0 0
    %56 = vperm.xlu0 %55, %v18
    %v57 = vpop.permute.xlu0 %56
    %60 = vset.pattern.permute.xlu0 0
    %61 = vperm.xlu0 %60, %v19
    %v62 = vpop.permute.xlu0 %61
    %65 = vset.pattern.permute.xlu0 0
    %66 = vperm.xlu0 %65, %v20
    %v67 = vpop.permute.xlu0 %66
    %70 = vset.pattern.permute.xlu0 0
    %71 = vperm.xlu0 %70, %v21
    %v72 = vpop.permute.xlu0 %71
    %75 = vset.pattern.permute.xlu0 0
    %76 = vperm.xlu0 %75, %v22
    %v77 = vpop.permute.xlu0 %76
    %80 = vset.pattern.permute.xlu0 0
    %81 = vperm.xlu0 %80, %v23
    %v82 = vpop.permute.xlu0 %81
    %85 = vset.pattern.permute.xlu0 0
    %86 = vperm.xlu0 %85, %v24
    %v87 = vpop.permute.xlu0 %86
    %90 = vset.pattern.permute.xlu0 0
    %91 = vperm.xlu0 %90, %v25
    %v92 = vpop.permute.xlu0 %91
    %95 = vset.pattern.permute.xlu0 0
    %96 = vperm.xlu0 %95, %v26
    %v97 = vpop.permute.xlu0 %96
    %100 = vset.pattern.permute.xlu0 0
    %101 = vperm.xlu0 %100, %v27
    %v102 = vpop.permute.xlu0 %101
    %105 = vset.pattern.permute.xlu0 0
    %106 = vperm.xlu0 %105, %v28
    %v107 = vpop.permute.xlu0 %106
    %v109 = vlaneseq
    %v110 = vshrl.u32 %v109, 7
    %v111 = vsub.s32 0, %v110
    %v112 = vrot.slane %v12, %v111
    %v113 = vmul.f32 %v32, %v112
    %v114 = vmul.f32 %v37, %v112
    %v115 = vmul.f32 %v42, %v112
    %v116 = vmul.f32 %v47, %v112
    %v117 = vmul.f32 %v52, %v112
    %v118 = vmul.f32 %v57, %v112
    %v119 = vmul.f32 %v62, %v112
    %v120 = vmul.f32 %v67, %v112
    %v121 = vmul.f32 %v72, %v112
    %v122 = vmul.f32 %v77, %v112
    %v123 = vmul.f32 %v82, %v112
    %v124 = vmul.f32 %v87, %v112
    %v125 = vmul.f32 %v92, %v112
    %v126 = vmul.f32 %v97, %v112
    %v127 = vmul.f32 %v102, %v112
    %v128 = vmul.f32 %v107, %v112
    %129 = vset.pattern.permute.xlu0 1
    %130 = vperm.xlu0 %129, %v13
    %v131 = vpop.permute.xlu0 %130
    %133 = vset.pattern.permute.xlu0 1
    %134 = vperm.xlu0 %133, %v14
    %v135 = vpop.permute.xlu0 %134
    %137 = vset.pattern.permute.xlu0 1
    %138 = vperm.xlu0 %137, %v15
    %v139 = vpop.permute.xlu0 %138
    %141 = vset.pattern.permute.xlu0 1
    %142 = vperm.xlu0 %141, %v16
    %v143 = vpop.permute.xlu0 %142
    %145 = vset.pattern.permute.xlu0 1
    %146 = vperm.xlu0 %145, %v17
    %v147 = vpop.permute.xlu0 %146
    %149 = vset.pattern.permute.xlu0 1
    %150 = vperm.xlu0 %149, %v18
    %v151 = vpop.permute.xlu0 %150
    %153 = vset.pattern.permute.xlu0 1
    %154 = vperm.xlu0 %153, %v19
    %v155 = vpop.permute.xlu0 %154
    %157 = vset.pattern.permute.xlu0 1
    %158 = vperm.xlu0 %157, %v20
    %v159 = vpop.permute.xlu0 %158
    %161 = vset.pattern.permute.xlu0 1
    %162 = vperm.xlu0 %161, %v21
    %v163 = vpop.permute.xlu0 %162
    %165 = vset.pattern.permute.xlu0 1
    %166 = vperm.xlu0 %165, %v22
    %v167 = vpop.permute.xlu0 %166
    %169 = vset.pattern.permute.xlu0 1
    %170 = vperm.xlu0 %169, %v23
    %v171 = vpop.permute.xlu0 %170
    %173 = vset.pattern.permute.xlu0 1
    %174 = vperm.xlu0 %173, %v24
    %v175 = vpop.permute.xlu0 %174
    %177 = vset.pattern.permute.xlu0 1
    %178 = vperm.xlu0 %177, %v25
    %v179 = vpop.permute.xlu0 %178
    %181 = vset.pattern.permute.xlu0 1
    %182 = vperm.xlu0 %181, %v26
    %v183 = vpop.permute.xlu0 %182
    %185 = vset.pattern.permute.xlu0 1
    %186 = vperm.xlu0 %185, %v27
    %v187 = vpop.permute.xlu0 %186
    %189 = vset.pattern.permute.xlu0 1
    %190 = vperm.xlu0 %189, %v28
    %v191 = vpop.permute.xlu0 %190
    %v193 = vlaneseq
    %v194 = vshrl.u32 %v193, 7
    %v195 = vsub.s32 1, %v194
    %v196 = vrot.slane %v12, %v195
    %v197 = vmul.f32 %v131, %v196
    %v198 = vmul.f32 %v135, %v196
    %v199 = vmul.f32 %v139, %v196
    %v200 = vmul.f32 %v143, %v196
    %v201 = vmul.f32 %v147, %v196
    %v202 = vmul.f32 %v151, %v196
    %v203 = vmul.f32 %v155, %v196
    %v204 = vmul.f32 %v159, %v196
    %v205 = vmul.f32 %v163, %v196
    %v206 = vmul.f32 %v167, %v196
    %v207 = vmul.f32 %v171, %v196
    %v208 = vmul.f32 %v175, %v196
    %v209 = vmul.f32 %v179, %v196
    %v210 = vmul.f32 %v183, %v196
    %v211 = vmul.f32 %v187, %v196
    %v212 = vmul.f32 %v191, %v196
    %v213 = vadd.f32 %v113, %v197
    %v214 = vadd.f32 %v114, %v198
    %v215 = vadd.f32 %v115, %v199
    %v216 = vadd.f32 %v116, %v200
    %v217 = vadd.f32 %v117, %v201
    %v218 = vadd.f32 %v118, %v202
    %v219 = vadd.f32 %v119, %v203
    %v220 = vadd.f32 %v120, %v204
    %v221 = vadd.f32 %v121, %v205
    %v222 = vadd.f32 %v122, %v206
    %v223 = vadd.f32 %v123, %v207
    %v224 = vadd.f32 %v124, %v208
    %v225 = vadd.f32 %v125, %v209
    %v226 = vadd.f32 %v126, %v210
    %v227 = vadd.f32 %v127, %v211
    %v228 = vadd.f32 %v128, %v212
    %229 = vset.pattern.permute.xlu0 2
    %230 = vperm.xlu0 %229, %v13
    %v231 = vpop.permute.xlu0 %230
    %233 = vset.pattern.permute.xlu0 2
    %234 = vperm.xlu0 %233, %v14
    %v235 = vpop.permute.xlu0 %234
    %237 = vset.pattern.permute.xlu0 2
    %238 = vperm.xlu0 %237, %v15
    %v239 = vpop.permute.xlu0 %238
    %241 = vset.pattern.permute.xlu0 2
    %242 = vperm.xlu0 %241, %v16
    %v243 = vpop.permute.xlu0 %242
    %245 = vset.pattern.permute.xlu0 2
    %246 = vperm.xlu0 %245, %v17
    %v247 = vpop.permute.xlu0 %246
    %249 = vset.pattern.permute.xlu0 2
    %250 = vperm.xlu0 %249, %v18
    %v251 = vpop.permute.xlu0 %250
    %253 = vset.pattern.permute.xlu0 2
    %254 = vperm.xlu0 %253, %v19
    %v255 = vpop.permute.xlu0 %254
    %257 = vset.pattern.permute.xlu0 2
    %258 = vperm.xlu0 %257, %v20
    %v259 = vpop.permute.xlu0 %258
    %261 = vset.pattern.permute.xlu0 2
    %262 = vperm.xlu0 %261, %v21
    %v263 = vpop.permute.xlu0 %262
    %265 = vset.pattern.permute.xlu0 2
    %266 = vperm.xlu0 %265, %v22
    %v267 = vpop.permute.xlu0 %266
    %269 = vset.pattern.permute.xlu0 2
    %270 = vperm.xlu0 %269, %v23
    %v271 = vpop.permute.xlu0 %270
    %273 = vset.pattern.permute.xlu0 2
    %274 = vperm.xlu0 %273, %v24
    %v275 = vpop.permute.xlu0 %274
    %277 = vset.pattern.permute.xlu0 2
    %278 = vperm.xlu0 %277, %v25
    %v279 = vpop.permute.xlu0 %278
    %281 = vset.pattern.permute.xlu0 2
    %282 = vperm.xlu0 %281, %v26
    %v283 = vpop.permute.xlu0 %282
    %285 = vset.pattern.permute.xlu0 2
    %286 = vperm.xlu0 %285, %v27
    %v287 = vpop.permute.xlu0 %286
    %289 = vset.pattern.permute.xlu0 2
    %290 = vperm.xlu0 %289, %v28
    %v291 = vpop.permute.xlu0 %290
    %v293 = vlaneseq
    %v294 = vshrl.u32 %v293, 7
    %v295 = vsub.s32 2, %v294
    %v296 = vrot.slane %v12, %v295
    %v297 = vmul.f32 %v231, %v296
    %v298 = vmul.f32 %v235, %v296
    %v299 = vmul.f32 %v239, %v296
    %v300 = vmul.f32 %v243, %v296
    %v301 = vmul.f32 %v247, %v296
    %v302 = vmul.f32 %v251, %v296
    %v303 = vmul.f32 %v255, %v296
    %v304 = vmul.f32 %v259, %v296
    %v305 = vmul.f32 %v263, %v296
    %v306 = vmul.f32 %v267, %v296
    %v307 = vmul.f32 %v271, %v296
    %v308 = vmul.f32 %v275, %v296
    %v309 = vmul.f32 %v279, %v296
    %v310 = vmul.f32 %v283, %v296
    %v311 = vmul.f32 %v287, %v296
    %v312 = vmul.f32 %v291, %v296
    %v313 = vadd.f32 %v213, %v297
    %v314 = vadd.f32 %v214, %v298
    %v315 = vadd.f32 %v215, %v299
    %v316 = vadd.f32 %v216, %v300
    %v317 = vadd.f32 %v217, %v301
    %v318 = vadd.f32 %v218, %v302
    %v319 = vadd.f32 %v219, %v303
    %v320 = vadd.f32 %v220, %v304
    %v321 = vadd.f32 %v221, %v305
    %v322 = vadd.f32 %v222, %v306
    %v323 = vadd.f32 %v223, %v307
    %v324 = vadd.f32 %v224, %v308
    %v325 = vadd.f32 %v225, %v309
    %v326 = vadd.f32 %v226, %v310
    %v327 = vadd.f32 %v227, %v311
    %v328 = vadd.f32 %v228, %v312
    %329 = vset.pattern.permute.xlu0 3
    %330 = vperm.xlu0 %329, %v13
    %v331 = vpop.permute.xlu0 %330
    %333 = vset.pattern.permute.xlu0 3
    %334 = vperm.xlu0 %333, %v14
    %v335 = vpop.permute.xlu0 %334
    %337 = vset.pattern.permute.xlu0 3
    %338 = vperm.xlu0 %337, %v15
    %v339 = vpop.permute.xlu0 %338
    %341 = vset.pattern.permute.xlu0 3
    %342 = vperm.xlu0 %341, %v16
    %v343 = vpop.permute.xlu0 %342
    %345 = vset.pattern.permute.xlu0 3
    %346 = vperm.xlu0 %345, %v17
    %v347 = vpop.permute.xlu0 %346
    %349 = vset.pattern.permute.xlu0 3
    %350 = vperm.xlu0 %349, %v18
    %v351 = vpop.permute.xlu0 %350
    %353 = vset.pattern.permute.xlu0 3
    %354 = vperm.xlu0 %353, %v19
    %v355 = vpop.permute.xlu0 %354
    %357 = vset.pattern.permute.xlu0 3
    %358 = vperm.xlu0 %357, %v20
    %v359 = vpop.permute.xlu0 %358
    %361 = vset.pattern.permute.xlu0 3
    %362 = vperm.xlu0 %361, %v21
    %v363 = vpop.permute.xlu0 %362
    %365 = vset.pattern.permute.xlu0 3
    %366 = vperm.xlu0 %365, %v22
    %v367 = vpop.permute.xlu0 %366
    %369 = vset.pattern.permute.xlu0 3
    %370 = vperm.xlu0 %369, %v23
    %v371 = vpop.permute.xlu0 %370
    %373 = vset.pattern.permute.xlu0 3
    %374 = vperm.xlu0 %373, %v24
    %v375 = vpop.permute.xlu0 %374
    %377 = vset.pattern.permute.xlu0 3
    %378 = vperm.xlu0 %377, %v25
    %v379 = vpop.permute.xlu0 %378
    %381 = vset.pattern.permute.xlu0 3
    %382 = vperm.xlu0 %381, %v26
    %v383 = vpop.permute.xlu0 %382
    %385 = vset.pattern.permute.xlu0 3
    %386 = vperm.xlu0 %385, %v27
    %v387 = vpop.permute.xlu0 %386
    %389 = vset.pattern.permute.xlu0 3
    %390 = vperm.xlu0 %389, %v28
    %v391 = vpop.permute.xlu0 %390
    %v393 = vlaneseq
    %v394 = vshrl.u32 %v393, 7
    %v395 = vsub.s32 3, %v394
    %v396 = vrot.slane %v12, %v395
    %v397 = vmul.f32 %v331, %v396
    %v398 = vmul.f32 %v335, %v396
    %v399 = vmul.f32 %v339, %v396
    %v400 = vmul.f32 %v343, %v396
    %v401 = vmul.f32 %v347, %v396
    %v402 = vmul.f32 %v351, %v396
    %v403 = vmul.f32 %v355, %v396
    %v404 = vmul.f32 %v359, %v396
    %v405 = vmul.f32 %v363, %v396
    %v406 = vmul.f32 %v367, %v396
    %v407 = vmul.f32 %v371, %v396
    %v408 = vmul.f32 %v375, %v396
    %v409 = vmul.f32 %v379, %v396
    %v410 = vmul.f32 %v383, %v396
    %v411 = vmul.f32 %v387, %v396
    %v412 = vmul.f32 %v391, %v396
    %v413 = vadd.f32 %v313, %v397
    %v414 = vadd.f32 %v314, %v398
    %v415 = vadd.f32 %v315, %v399
    %v416 = vadd.f32 %v316, %v400
    %v417 = vadd.f32 %v317, %v401
    %v418 = vadd.f32 %v318, %v402
    %v419 = vadd.f32 %v319, %v403
    %v420 = vadd.f32 %v320, %v404
    %v421 = vadd.f32 %v321, %v405
    %v422 = vadd.f32 %v322, %v406
    %v423 = vadd.f32 %v323, %v407
    %v424 = vadd.f32 %v324, %v408
    %v425 = vadd.f32 %v325, %v409
    %v426 = vadd.f32 %v326, %v410
    %v427 = vadd.f32 %v327, %v411
    %v428 = vadd.f32 %v328, %v412
    %429 = vset.pattern.permute.xlu0 4
    %430 = vperm.xlu0 %429, %v13
    %v431 = vpop.permute.xlu0 %430
    %433 = vset.pattern.permute.xlu0 4
    %434 = vperm.xlu0 %433, %v14
    %v435 = vpop.permute.xlu0 %434
    %437 = vset.pattern.permute.xlu0 4
    %438 = vperm.xlu0 %437, %v15
    %v439 = vpop.permute.xlu0 %438
    %441 = vset.pattern.permute.xlu0 4
    %442 = vperm.xlu0 %441, %v16
    %v443 = vpop.permute.xlu0 %442
    %445 = vset.pattern.permute.xlu0 4
    %446 = vperm.xlu0 %445, %v17
    %v447 = vpop.permute.xlu0 %446
    %449 = vset.pattern.permute.xlu0 4
    %450 = vperm.xlu0 %449, %v18
    %v451 = vpop.permute.xlu0 %450
    %453 = vset.pattern.permute.xlu0 4
    %454 = vperm.xlu0 %453, %v19
    %v455 = vpop.permute.xlu0 %454
    %457 = vset.pattern.permute.xlu0 4
    %458 = vperm.xlu0 %457, %v20
    %v459 = vpop.permute.xlu0 %458
    %461 = vset.pattern.permute.xlu0 4
    %462 = vperm.xlu0 %461, %v21
    %v463 = vpop.permute.xlu0 %462
    %465 = vset.pattern.permute.xlu0 4
    %466 = vperm.xlu0 %465, %v22
    %v467 = vpop.permute.xlu0 %466
    %469 = vset.pattern.permute.xlu0 4
    %470 = vperm.xlu0 %469, %v23
    %v471 = vpop.permute.xlu0 %470
    %473 = vset.pattern.permute.xlu0 4
    %474 = vperm.xlu0 %473, %v24
    %v475 = vpop.permute.xlu0 %474
    %477 = vset.pattern.permute.xlu0 4
    %478 = vperm.xlu0 %477, %v25
    %v479 = vpop.permute.xlu0 %478
    %481 = vset.pattern.permute.xlu0 4
    %482 = vperm.xlu0 %481, %v26
    %v483 = vpop.permute.xlu0 %482
    %485 = vset.pattern.permute.xlu0 4
    %486 = vperm.xlu0 %485, %v27
    %v487 = vpop.permute.xlu0 %486
    %489 = vset.pattern.permute.xlu0 4
    %490 = vperm.xlu0 %489, %v28
    %v491 = vpop.permute.xlu0 %490
    %v493 = vadd.f32 %v413, %v431
    %v494 = vadd.f32 %v414, %v435
    %v495 = vadd.f32 %v415, %v439
    %v496 = vadd.f32 %v416, %v443
    %v497 = vadd.f32 %v417, %v447
    %v498 = vadd.f32 %v418, %v451
    %v499 = vadd.f32 %v419, %v455
    %v500 = vadd.f32 %v420, %v459
    %v501 = vadd.f32 %v421, %v463
    %v502 = vadd.f32 %v422, %v467
    %v503 = vadd.f32 %v423, %v471
    %v504 = vadd.f32 %v424, %v475
    %v505 = vadd.f32 %v425, %v479
    %v506 = vadd.f32 %v426, %v483
    %v507 = vadd.f32 %v427, %v487
    %v508 = vadd.f32 %v428, %v491
    %v509 = vmax.f32 %v493, 0.0
    %v510 = vmax.f32 %v494, 0.0
    %v511 = vmax.f32 %v495, 0.0
    %v512 = vmax.f32 %v496, 0.0
    %v513 = vmax.f32 %v497, 0.0
    %v514 = vmax.f32 %v498, 0.0
    %v515 = vmax.f32 %v499, 0.0
    %v516 = vmax.f32 %v500, 0.0
    %v517 = vmax.f32 %v501, 0.0
    %v518 = vmax.f32 %v502, 0.0
    %v519 = vmax.f32 %v503, 0.0
    %v520 = vmax.f32 %v504, 0.0
    %v521 = vmax.f32 %v505, 0.0
    %v522 = vmax.f32 %v506, 0.0
    %v523 = vmax.f32 %v507, 0.0
    %v524 = vmax.f32 %v508, 0.0
    %525 = vset.pattern.permute.xlu0 5
    %526 = vperm.xlu0 %525, %v13
    %v527 = vpop.permute.xlu0 %526
    %529 = vset.pattern.permute.xlu0 5
    %530 = vperm.xlu0 %529, %v14
    %v531 = vpop.permute.xlu0 %530
    %533 = vset.pattern.permute.xlu0 5
    %534 = vperm.xlu0 %533, %v15
    %v535 = vpop.permute.xlu0 %534
    %537 = vset.pattern.permute.xlu0 5
    %538 = vperm.xlu0 %537, %v16
    %v539 = vpop.permute.xlu0 %538
    %541 = vset.pattern.permute.xlu0 5
    %542 = vperm.xlu0 %541, %v17
    %v543 = vpop.permute.xlu0 %542
    %545 = vset.pattern.permute.xlu0 5
    %546 = vperm.xlu0 %545, %v18
    %v547 = vpop.permute.xlu0 %546
    %549 = vset.pattern.permute.xlu0 5
    %550 = vperm.xlu0 %549, %v19
    %v551 = vpop.permute.xlu0 %550
    %553 = vset.pattern.permute.xlu0 5
    %554 = vperm.xlu0 %553, %v20
    %v555 = vpop.permute.xlu0 %554
    %557 = vset.pattern.permute.xlu0 5
    %558 = vperm.xlu0 %557, %v21
    %v559 = vpop.permute.xlu0 %558
    %561 = vset.pattern.permute.xlu0 5
    %562 = vperm.xlu0 %561, %v22
    %v563 = vpop.permute.xlu0 %562
    %565 = vset.pattern.permute.xlu0 5
    %566 = vperm.xlu0 %565, %v23
    %v567 = vpop.permute.xlu0 %566
    %569 = vset.pattern.permute.xlu0 5
    %570 = vperm.xlu0 %569, %v24
    %v571 = vpop.permute.xlu0 %570
    %573 = vset.pattern.permute.xlu0 5
    %574 = vperm.xlu0 %573, %v25
    %v575 = vpop.permute.xlu0 %574
    %577 = vset.pattern.permute.xlu0 5
    %578 = vperm.xlu0 %577, %v26
    %v579 = vpop.permute.xlu0 %578
    %581 = vset.pattern.permute.xlu0 5
    %582 = vperm.xlu0 %581, %v27
    %v583 = vpop.permute.xlu0 %582
    %585 = vset.pattern.permute.xlu0 5
    %586 = vperm.xlu0 %585, %v28
    %v587 = vpop.permute.xlu0 %586
    %v589 = vmul.f32 %v509, %v527
    %v590 = vmul.f32 %v510, %v531
    %v591 = vmul.f32 %v511, %v535
    %v592 = vmul.f32 %v512, %v539
    %v593 = vmul.f32 %v513, %v543
    %v594 = vmul.f32 %v514, %v547
    %v595 = vmul.f32 %v515, %v551
    %v596 = vmul.f32 %v516, %v555
    %v597 = vmul.f32 %v517, %v559
    %v598 = vmul.f32 %v518, %v563
    %v599 = vmul.f32 %v519, %v567
    %v600 = vmul.f32 %v520, %v571
    %v601 = vmul.f32 %v521, %v575
    %v602 = vmul.f32 %v522, %v579
    %v603 = vmul.f32 %v523, %v583
    %v604 = vmul.f32 %v524, %v587
    %v605 = vadd.f32 %v589, %v590
    %v606 = vadd.f32 %v605, %v591
    %v607 = vadd.f32 %v606, %v592
    %v608 = vadd.f32 %v607, %v593
    %v609 = vadd.f32 %v608, %v594
    %v610 = vadd.f32 %v609, %v595
    %v611 = vadd.f32 %v610, %v596
    %v612 = vadd.f32 %v611, %v597
    %v613 = vadd.f32 %v612, %v598
    %v614 = vadd.f32 %v613, %v599
    %v615 = vadd.f32 %v614, %v600
    %v616 = vadd.f32 %v615, %v601
    %v617 = vadd.f32 %v616, %v602
    %v618 = vadd.f32 %v617, %v603
    %v619 = vadd.f32 %v618, %v604
    %v620 = vrot.slane %v619, 4
    %v621 = vadd.f32 %v619, %v620
    %v622 = vrot.slane %v621, 2
    %v623 = vadd.f32 %v621, %v622
    %v624 = vrot.slane %v623, 1
    %v625 = vadd.f32 %v623, %v624
    %v626 = vld [vmem:[%s1] sm:$0x1]
    %628 = vset.pattern.permute.xlu0 6
    %629 = vperm.xlu0 %628, %v626
    %v630 = vpop.permute.xlu0 %629
    %v632 = vadd.f32 %v625, %v630
    %v633 = vld [vmem:[%s1] sm:$0x3]
    %v634 = vmul.f32 %v633, 0.5
    %636 = vset.pattern.permute.xlu0 7
    %637 = vperm.xlu0 %636, %v634
    %v638 = vpop.permute.xlu0 %637
    %v640 = vlaneseq
    %v641 = vshrl.u32 %v640, 7
    %v642 = vsub.s32 0, %v641
    %v643 = vrot.slane %v632, %v642
    %v644 = vmul.f32 %v638, %v643
    %v645 = vtanh.pop %v644
    %v646 = vadd.f32 %v645, 1.0
    %v647 = vmul.f32 %v646, 0.5
    %648 = vst [vmem:[#allocation2] sm:$0x3] %v647
    // Predicated region
    $region10: #{_policy_forward_padded.1} parent=1 // pred_check
      _
    $region11: #{_policy_forward_padded.1} parent=1 // pred_check_branch
      %650 = sbr.rel (0) target = $region13
    $region12: #{_policy_forward_padded.1} parent=1 // pred_region
      %s652 = ssub.s32 32, 32
      %653 = vsyncadd [#allocation3], %s652
      %s655 = sshll.u32 [#allocation2], 4
      %s656 = int_to_ptr.vmem [resolvable:$true] %s655
      %658 = dma.vmem_to_hbm [thread:$0]  %s656, 32, %s2, [#allocation3]
    $region13: #{_policy_forward_padded.1} parent=1 // pred_fallthru
      _
    // Predicated region
    $region14: #{_policy_forward_padded.1} parent=1 // pred_check
      _
    $region15: #{_policy_forward_padded.1} parent=1 // pred_check_branch
      %660 = sbr.rel (0) target = $region17
    $region16: #{_policy_forward_padded.1} parent=1 // pred_region
      %661 = dma.done [#allocation3], 32
    $region17: #{_policy_forward_padded.1} parent=1 // pred_fallthru
      _
    %662 = vsyncpa [#allocation3], 1

</llo_original>
